<compile_context>
chip_gen: v7x
topology: tpu7x:2x2x1
jax: 0.10.0
libtpu: 0.0.40
codegen_flags: <defaults>
</compile_context>

<pallas_src>
import functools

import jax
import jax.numpy as jnp
from jax.experimental import pallas as pl
from jax.experimental.pallas import tpu as pltpu

_TARGET_TILE_BYTES = 8 * 1024 * 1024  # per-input VMEM tile target (f32)


def _round_up(x, m):
    return (x + m - 1) // m * m


def _largest_divisor_leq(n, limit):
    limit = max(1, min(limit, n))
    for k in range(limit, 0, -1):
        if n % k == 0:
            return k
    return 1


def _vmem_limit(tile_vmem_bytes):
    # 2 inputs x 2 pipeline buffers x tile + slack for outputs / internal scratch.
    need = 4 * tile_vmem_bytes + (4 << 20)
    return int(min(max(need, 16 << 20), 112 << 20))


# ---------------------------------------------------------------------------
# Flat path: (B, H*W) blocks, roll+mask diffs. Best for small / medium images.
# ---------------------------------------------------------------------------
def _gdl_flat_kernel(y_ref, yhat_ref, out_ref, *, w, total_rows, block_rows):
    y = y_ref[...].astype(jnp.float32)       # (tb, HW)
    yh = yhat_ref[...].astype(jnp.float32)   # (tb, HW)
    hw = y.shape[1]

    shift_h = 1 % hw   # degenerate-shape guards (H==1 or W==1 contribute 0 anyway)
    shift_v = w % hw

    # Backward differences via XLU roll along the flattened (H*W) lane axis:
    #   horizontal: x[i] - x[i-1], valid where i % W != 0
    #   vertical:   x[i] - x[i-W], valid where i >= W
    dh = jnp.abs(jnp.abs(y - pltpu.roll(y, shift=shift_h, axis=1))
                 - jnp.abs(yh - pltpu.roll(yh, shift=shift_h, axis=1)))
    dv = jnp.abs(jnp.abs(y - pltpu.roll(y, shift=shift_v, axis=1))
                 - jnp.abs(yh - pltpu.roll(yh, shift=shift_v, axis=1)))

    # Validity masks generated in-kernel (no mask input / DMA stream needed).
    lane = jax.lax.broadcasted_iota(jnp.int32, (1, hw), 1)
    mask_h = (lane % w) != 0     # invalid at column 0 of each image row
    mask_v = lane >= w           # invalid for the first image row

    combined = jnp.where(mask_h, dh, 0.0) + jnp.where(mask_v, dv, 0.0)

    # Mask rows of the (possibly ragged) last block instead of padding in HBM.
    row = (jax.lax.broadcasted_iota(jnp.int32, (y.shape[0], 1), 0)
           + pl.program_id(0) * block_rows)
    combined = jnp.where(row < total_rows, combined, 0.0)

    out_ref[...] = jnp.full(out_ref.shape, jnp.sum(combined), dtype=out_ref.dtype)


def _gdl_flat(y2, yhat2, w, target_tile_bytes=_TARGET_TILE_BYTES):
    b, hw = y2.shape
    row_vmem = _round_up(hw, 128) * 4  # lane-padded f32 bytes per flattened image

    if b <= 8:
        tb = b                          # block dim equal to full dim is allowed
    else:
        tb = max(8, (target_tile_bytes // row_vmem) // 8 * 8)
        # Keep >= 2 grid steps whenever possible so both v7x TensorCores get work.
        tb = min(tb, _round_up(pl.cdiv(b, 2), 8), _round_up(b, 8))
    num_blocks = pl.cdiv(b, tb)

    kernel = functools.partial(_gdl_flat_kernel, w=w, total_rows=b, block_rows=tb)
    partials = pl.pallas_call(
        kernel,
        out_shape=jax.ShapeDtypeStruct((num_blocks, 8, 128), jnp.float32),
        grid_spec=pltpu.PrefetchScalarGridSpec(
            num_scalar_prefetch=0,
            grid=(num_blocks,),
            in_specs=[
                pl.BlockSpec((tb, hw), lambda i: (i, 0)),
                pl.BlockSpec((tb, hw), lambda i: (i, 0)),
            ],
            out_specs=pl.BlockSpec((1, 8, 128), lambda i: (i, 0, 0)),
        ),
        compiler_params=pltpu.CompilerParams(
            dimension_semantics=("parallel",),
            vmem_limit_bytes=_vmem_limit(tb * row_vmem),
        ),
    )(y2, yhat2)
    return jnp.sum(partials[:, 0, 0])


# ---------------------------------------------------------------------------
# Row-major path: (B, H, W) blocks of whole images, for large H*W.
# ---------------------------------------------------------------------------
def _gdl_rowmajor_kernel(y_ref, yhat_ref, out_ref):
    y = y_ref[...].astype(jnp.float32)       # (kb, H, W)
    yh = yhat_ref[...].astype(jnp.float32)

    partial = jnp.zeros((), dtype=jnp.float32)
    if y.shape[2] > 1:  # horizontal diffs (along W)
        dh = jnp.abs(jnp.abs(y[:, :, 1:] - y[:, :, :-1])
                     - jnp.abs(yh[:, :, 1:] - yh[:, :, :-1]))
        partial = partial + jnp.sum(dh)
    if y.shape[1] > 1:  # vertical diffs (along H)
        dv = jnp.abs(jnp.abs(y[:, 1:, :] - y[:, :-1, :])
                     - jnp.abs(yh[:, 1:, :] - yh[:, :-1, :]))
        partial = partial + jnp.sum(dv)
    out_ref[...] = jnp.full(out_ref.shape, partial, dtype=out_ref.dtype)


def _gdl_rowmajor(y3, yhat3, target_tile_bytes=_TARGET_TILE_BYTES):
    b, h, w = y3.shape
    img_vmem = _round_up(h, 8) * _round_up(w, 128) * 4

    kb_cap = max(1, target_tile_bytes // img_vmem)
    if b >= 2:
        kb_cap = min(kb_cap, pl.cdiv(b, 2))  # >= 2 grid steps (v7x megacore)
    kb = _largest_divisor_leq(b, kb_cap)      # exact division -> no ragged block
    num_blocks = b // kb
    # TODO(synk): single images exceeding the tile budget (~>1400x1400 f32) would
    # need intra-image H tiling with a one-row halo; not implemented here.

    partials = pl.pallas_call(
        _gdl_rowmajor_kernel,
        out_shape=jax.ShapeDtypeStruct((num_blocks, 8, 128), jnp.float32),
        grid_spec=pltpu.PrefetchScalarGridSpec(
            num_scalar_prefetch=0,
            grid=(num_blocks,),
            in_specs=[
                pl.BlockSpec((kb, h, w), lambda i: (i, 0, 0)),
                pl.BlockSpec((kb, h, w), lambda i: (i, 0, 0)),
            ],
            out_specs=pl.BlockSpec((1, 8, 128), lambda i: (i, 0, 0)),
        ),
        compiler_params=pltpu.CompilerParams(
            dimension_semantics=("parallel",),
            vmem_limit_bytes=_vmem_limit(kb * img_vmem),
        ),
    )(y3, yhat3)
    return jnp.sum(partials[:, 0, 0])


# ---------------------------------------------------------------------------
# Public wrapper (matches the PyTorch module's forward).
# ---------------------------------------------------------------------------
def image_gradient_difference_loss(y, yhat, alpha=1):
    """y, yhat: 5-D arrays (N, C, D, H, W). Returns the scalar float32 GDL.

    `alpha` is accepted for API parity with the PyTorch module (unused there too).
    """
    del alpha
    assert y.shape == yhat.shape and y.ndim == 5
    n, c, d, h, w = y.shape
    b = n * c * d
    hw = h * w

    # Flat (lane-dense) path iff its minimum 8-row tile fits the tile budget.
    min_flat_tile = min(8, max(b, 1)) * _round_up(hw, 128) * 4
    if min_flat_tile <= _TARGET_TILE_BYTES:
        return _gdl_flat(y.reshape(b, hw), yhat.reshape(b, hw), w)
    return _gdl_rowmajor(y.reshape(b, h, w), yhat.reshape(b, h, w))


def _reference_gdl(y, yhat):
    y_h = jnp.abs(jnp.diff(y, axis=4))
    yh_h = jnp.abs(jnp.diff(yhat, axis=4))
    y_v = jnp.abs(jnp.diff(y, axis=3))
    yh_v = jnp.abs(jnp.diff(yhat, axis=3))
    return jnp.sum(jnp.abs(y_h - yh_h)) + jnp.sum(jnp.abs(y_v - yh_v))


if __name__ == "__main__":
    key = jax.random.PRNGKey(0)
    k1, k2 = jax.random.split(key)
    shape = (2, 2, 4, 16, 16)  # (N, C, D, H, W)
    y = jax.random.normal(k1, shape, dtype=jnp.float32)
    yhat = jax.random.normal(k2, shape, dtype=jnp.float32)

    ref = jax.block_until_ready(_reference_gdl(y, yhat))

    # Default (flat / lane-dense) path.
    loss = jax.block_until_ready(image_gradient_difference_loss(y, yhat))
    assert jnp.allclose(loss, ref, rtol=1e-4, atol=1e-2), (loss, ref)

    # Also exercise the large-image (row-major) path at this small shape.
    loss_rm = jax.block_until_ready(
        _gdl_rowmajor(y.reshape(-1, 16, 16), yhat.reshape(-1, 16, 16)))
    assert jnp.allclose(loss_rm, ref, rtol=1e-4, atol=1e-2), (loss_rm, ref)

    print("KERNEL_OK")
</pallas_src>

<mosaic_0001>
module attributes {stable_mosaic.version = 11 : i64} {
  func.func @_gdl_flat_kernel(%arg0: i32, %arg1: memref<8x256xf32, #tpu.memory_space<vmem>>, %arg2: memref<8x256xf32, #tpu.memory_space<vmem>>, %arg3: memref<1x8x128xf32, #tpu.memory_space<vmem>>) attributes {dimension_semantics = [#tpu.dimension_semantics<parallel>], iteration_bounds = array<i64: 2>, scalar_prefetch = 0 : i64, scratch_operands = 0 : i64, tpu.core_type = #tpu.core_type<tc>, window_params = [{transform_indices = @transform_0, window_bounds = array<i64: 8, 256>}, {transform_indices = @transform_1, window_bounds = array<i64: 8, 256>}, {transform_indices = @transform_2, window_bounds = array<i64: 1, 8, 128>}]} {
    %c0 = arith.constant 0 : index
    %c0_0 = arith.constant 0 : index
    %0 = vector.load %arg1[%c0, %c0_0] : memref<8x256xf32, #tpu.memory_space<vmem>>, vector<8x256xf32>
    %c0_1 = arith.constant 0 : index
    %c0_2 = arith.constant 0 : index
    %1 = vector.load %arg2[%c0_1, %c0_2] : memref<8x256xf32, #tpu.memory_space<vmem>>, vector<8x256xf32>
    %c1_i32 = arith.constant 1 : i32
    %2 = tpu.dynamic_rotate %0 by %c1_i32 dim 1 : vector<8x256xf32>, i32 -> vector<8x256xf32>
    %3 = arith.subf %0, %2 : vector<8x256xf32>
    %4 = math.absf %3 : vector<8x256xf32>
    %c1_i32_3 = arith.constant 1 : i32
    %5 = tpu.dynamic_rotate %1 by %c1_i32_3 dim 1 : vector<8x256xf32>, i32 -> vector<8x256xf32>
    %6 = arith.subf %1, %5 : vector<8x256xf32>
    %7 = math.absf %6 : vector<8x256xf32>
    %8 = arith.subf %4, %7 : vector<8x256xf32>
    %9 = math.absf %8 : vector<8x256xf32>
    %c16_i32 = arith.constant 16 : i32
    %10 = tpu.dynamic_rotate %0 by %c16_i32 dim 1 : vector<8x256xf32>, i32 -> vector<8x256xf32>
    %11 = arith.subf %0, %10 : vector<8x256xf32>
    %12 = math.absf %11 : vector<8x256xf32>
    %c16_i32_4 = arith.constant 16 : i32
    %13 = tpu.dynamic_rotate %1 by %c16_i32_4 dim 1 : vector<8x256xf32>, i32 -> vector<8x256xf32>
    %14 = arith.subf %1, %13 : vector<8x256xf32>
    %15 = math.absf %14 : vector<8x256xf32>
    %16 = arith.subf %12, %15 : vector<8x256xf32>
    %17 = math.absf %16 : vector<8x256xf32>
    %18 = tpu.iota {dimensions = array<i32: 1>} : vector<1x256xi32>
    %c16_i32_5 = arith.constant 16 : i32
    %c0_i32 = arith.constant 0 : i32
    %19 = arith.cmpi eq, %c16_i32_5, %c0_i32 : i32
    %c1_i32_6 = arith.constant 1 : i32
    %20 = arith.select %19, %c1_i32_6, %c16_i32_5 : i32
    %21 = vector.broadcast %20 : i32 to vector<1x256xi32>
    %22 = arith.remsi %18, %21 : vector<1x256xi32>
    %c0_i32_7 = arith.constant 0 : i32
    %23 = vector.broadcast %c0_i32_7 : i32 to vector<1x256xi32>
    %24 = arith.cmpi ne, %22, %23 : vector<1x256xi32>
    %c0_i32_8 = arith.constant 0 : i32
    %25 = vector.broadcast %c0_i32_8 : i32 to vector<1x256xi32>
    %26 = arith.cmpi slt, %22, %25 : vector<1x256xi32>
    %c0_i32_9 = arith.constant 0 : i32
    %27 = arith.cmpi slt, %20, %c0_i32_9 : i32
    %28 = vector.broadcast %27 : i1 to vector<1x256xi1>
    %29 = vector.broadcast %28 : vector<1x256xi1> to vector<1x256xi1>
    %30 = arith.xori %26, %29 : vector<1x256xi1>
    %31 = arith.andi %30, %24 : vector<1x256xi1>
    %32 = vector.broadcast %20 : i32 to vector<1x256xi32>
    %33 = arith.addi %22, %32 : vector<1x256xi32>
    %34 = arith.select %31, %33, %22 : vector<1x256xi1>, vector<1x256xi32>
    %c0_i32_10 = arith.constant 0 : i32
    %35 = vector.broadcast %c0_i32_10 : i32 to vector<1x256xi32>
    %36 = arith.cmpi ne, %34, %35 : vector<1x256xi32>
    %c16_i32_11 = arith.constant 16 : i32
    %37 = vector.broadcast %c16_i32_11 : i32 to vector<1x256xi32>
    %38 = arith.cmpi sge, %18, %37 : vector<1x256xi32>
    %cst = arith.constant 0.000000e+00 : f32
    %39 = vector.shape_cast %36 : vector<1x256xi1> to vector<1x256xi1>
    %40 = vector.broadcast %39 : vector<1x256xi1> to vector<8x256xi1>
    %41 = vector.broadcast %cst : f32 to vector<8x256xf32>
    %42 = arith.select %40, %9, %41 : vector<8x256xi1>, vector<8x256xf32>
    %cst_12 = arith.constant 0.000000e+00 : f32
    %43 = vector.shape_cast %38 : vector<1x256xi1> to vector<1x256xi1>
    %44 = vector.broadcast %43 : vector<1x256xi1> to vector<8x256xi1>
    %45 = vector.broadcast %cst_12 : f32 to vector<8x256xf32>
    %46 = arith.select %44, %17, %45 : vector<8x256xi1>, vector<8x256xf32>
    %47 = arith.addf %42, %46 : vector<8x256xf32>
    %48 = tpu.iota {dimensions = array<i32: 0>} : vector<8x1xi32>
    %c8_i32 = arith.constant 8 : i32
    %49 = arith.muli %arg0, %c8_i32 : i32
    %50 = vector.broadcast %49 : i32 to vector<8x1xi32>
    %51 = arith.addi %48, %50 : vector<8x1xi32>
    %c16_i32_13 = arith.constant 16 : i32
    %52 = vector.broadcast %c16_i32_13 : i32 to vector<8x1xi32>
    %53 = arith.cmpi slt, %51, %52 : vector<8x1xi32>
    %cst_14 = arith.constant 0.000000e+00 : f32
    %54 = vector.shape_cast %53 : vector<8x1xi1> to vector<8x1xi1>
    %55 = vector.broadcast %54 : vector<8x1xi1> to vector<8x256xi1>
    %56 = vector.broadcast %cst_14 : f32 to vector<8x256xf32>
    %57 = arith.select %55, %47, %56 : vector<8x256xi1>, vector<8x256xf32>
    %58 = vector.shape_cast %57 : vector<8x256xf32> to vector<1x8x256xf32>
    %cst_15 = arith.constant dense<0.000000e+00> : vector<1xf32>
    %59 = vector.multi_reduction <add>, %58, %cst_15 [1, 2] : vector<1x8x256xf32> to vector<1xf32>
    %60 = vector.shape_cast %59 : vector<1xf32> to vector<1x1x1xf32>
    %61 = vector.extract %60[0, 0, 0] : f32 from vector<1x1x1xf32>
    %62 = vector.broadcast %61 : f32 to vector<1x8x128xf32>
    %c0_16 = arith.constant 0 : index
    %c0_17 = arith.constant 0 : index
    %c0_18 = arith.constant 0 : index
    %63 = vector.load %arg3[%c0_16, %c0_17, %c0_18] : memref<1x8x128xf32, #tpu.memory_space<vmem>>, vector<1x8x128xf32>
    tpu.vector_store %arg3[%c0_16, %c0_17, %c0_18], %62 {strides = array<i32>} : memref<1x8x128xf32, #tpu.memory_space<vmem>>, vector<1x8x128xf32>,
    return
  }
  func.func @transform_0(%arg0: i32) -> (i32, i32) {
    %c0_i32 = arith.constant 0 : i32
    %c0_i32_0 = arith.constant 0 : i32
    return %arg0, %c0_i32 : i32, i32
  }
  func.func @transform_1(%arg0: i32) -> (i32, i32) {
    %c0_i32 = arith.constant 0 : i32
    %c0_i32_0 = arith.constant 0 : i32
    return %arg0, %c0_i32 : i32, i32
  }
  func.func @transform_2(%arg0: i32) -> (i32, i32, i32) {
    %c0_i32 = arith.constant 0 : i32
    %c0_i32_0 = arith.constant 0 : i32
    %c0_i32_1 = arith.constant 0 : i32
    return %arg0, %c0_i32, %c0_i32_0 : i32, i32, i32
  }
}

</mosaic_0001>

<llo_original>
// kernel: tpu_custom_call.1
$region0: #{tpu_custom_call.1}
  #allocation0 [shape = 'u32[]', space=smem, size = 0x4, offset = 0x4, fixed_abs, tag = 'smem constant byte address 0x4 - core index']
  #allocation1 [shape = 'u32[144,128]{1,0:T(1,128)}', space=vmem, size = 0x12000, scoped, tag = 'internal scratch']
  %s0 = inlined_call_operand.hbm [shape: f32[16,256], index: 0, kind: input, shape index: {}]
  %s1 = inlined_call_operand.hbm [shape: f32[16,256], index: 1, kind: input, shape index: {}]
  %s2 = inlined_call_operand.hbm [shape: f32[2,8,128], index: 2, kind: output, shape index: {}]
  %s3 = sld [smem:[#allocation0]]
  $region49: #{tpu_custom_call.1} parent=0
    _
  %s5 = ssub.s32 1, %s3
  %s6 = scalar_select 0, %s5, %s3
  $region1: #{tpu_custom_call.1} parent=0
    #allocation2 [shape = 'u8[16384]{0}', space=vmem, size = 0x4000, scoped, tag = 'input window, operand 0']
    #allocation3 [shape = 's32[2]{0}', space=sflag, size = 0x8, scoped, tag = 'scoped memory for tpu_custom_call.1']
    #allocation4 [shape = 's32[2]{0}', space=sflag, size = 0x8, scoped, tag = 'scoped memory for tpu_custom_call.1']
    #allocation5 [shape = 'u8[16384]{0}', space=vmem, size = 0x4000, scoped, tag = 'input window, operand 1']
    #allocation6 [shape = 's32[2]{0}', space=sflag, size = 0x8, scoped, tag = 'scoped memory for tpu_custom_call.1']
    #allocation7 [shape = 'u8[8192]{0}', space=vmem, size = 0x2000, scoped, tag = 'output window, operand 0']
    %7 = vsyncpa [#allocation3], 0
    %s8 = scalar_lea.sflag [#allocation3], 1
    %9 = vsyncpa %s8, 0
    %10 = vsyncpa [#allocation6], 0
    %s11 = scalar_lea.sflag [#allocation6], 1
    %12 = vsyncpa %s11, 0
    %13 = vsyncpa [#allocation4], 0
    %s14 = scalar_lea.sflag [#allocation4], 1
    %15 = vsyncpa %s14, 0
    loop: start=0, step=1, limit=4
    $region2: #{tpu_custom_call.1} parent=1 // loop_pre_header
      _
    $region3: #{tpu_custom_call.1} parent=1 // loop_header
      %s17 = sphi 0, %s21
      %p18 = scmp.ge.s32.totalorder %s17, 4
      %s27 = sphi 0, %s29
      %s30 = sphi 0, %s27
      %s31 = sphi 0, %s30
      %s47 = sphi 0, %s31
      %s53 = sphi 0, %s55
      %s56 = sphi 0, %s53
      %s57 = sphi 0, %s56
      %s73 = sphi 0, %s57
      %s79 = sphi 0, %s81
      %s82 = sphi 0, %s79
      %s83 = sphi 0, %s82
      %s99 = sphi 0, %s83
    $region4: #{tpu_custom_call.1} parent=1 // loop_header_branch
      %20 = sbr.rel (%p18) target = $region8
    $region5: #{tpu_custom_call.1} parent=1 // loop_body
      %s22 = ssub.s32 %s17, 1
      %s23 = ssub.s32 %s17, 2
      %s24 = sadd.s32 %s17, 1
      %s25 = ssub.s32 %s17, %s24
      %p26 = scmp.eq.s32.totalorder %s25, 0
      %s28 = sadd.s32 %s27, 1
      %s29 = scalar_select %p26, %s27, %s28
      %p32 = pneg %p26
      %p33 = scmp.eq.s32.totalorder %s17, 1
      %p34 = por %p32, %p33
      %p35 = scmp.ne.s32.totalorder %s27, %s30
      %p36 = scmp.eq.s32.totalorder %s17, 0
      %p37 = por %p35, %p36
      %p38 = scmp.ne.s32.totalorder %s27, %s30
      %p39 = scmp.eq.s32.totalorder %s22, 1
      %p40 = por %p38, %p39
      %p41 = scmp.ne.s32.totalorder %s30, %s31
      %p42 = scmp.eq.s32.totalorder %s22, 0
      %p43 = por %p41, %p42
      %p44 = scmp.ne.s32.totalorder %s30, %s31
      %p45 = scmp.eq.s32.totalorder %s23, 1
      %p46 = por %p44, %p45
      %p48 = scmp.ne.s32.totalorder %s31, %s47
      %p49 = scmp.eq.s32.totalorder %s23, 0
      %p50 = por %p48, %p49
      %s51 = ssub.s32 %s17, %s24
      %p52 = scmp.eq.s32.totalorder %s51, 0
      %s54 = sadd.s32 %s53, 1
      %s55 = scalar_select %p52, %s53, %s54
      %p58 = pneg %p52
      %p59 = scmp.eq.s32.totalorder %s17, 1
      %p60 = por %p58, %p59
      %p61 = scmp.ne.s32.totalorder %s53, %s56
      %p62 = scmp.eq.s32.totalorder %s17, 0
      %p63 = por %p61, %p62
      %p64 = scmp.ne.s32.totalorder %s53, %s56
      %p65 = scmp.eq.s32.totalorder %s22, 1
      %p66 = por %p64, %p65
      %p67 = scmp.ne.s32.totalorder %s56, %s57
      %p68 = scmp.eq.s32.totalorder %s22, 0
      %p69 = por %p67, %p68
      %p70 = scmp.ne.s32.totalorder %s56, %s57
      %p71 = scmp.eq.s32.totalorder %s23, 1
      %p72 = por %p70, %p71
      %p74 = scmp.ne.s32.totalorder %s57, %s73
      %p75 = scmp.eq.s32.totalorder %s23, 0
      %p76 = por %p74, %p75
      %s77 = ssub.s32 %s17, %s24
      %p78 = scmp.eq.s32.totalorder %s77, 0
      %s80 = sadd.s32 %s79, 1
      %s81 = scalar_select %p78, %s79, %s80
      %p84 = pneg %p78
      %p85 = scmp.eq.s32.totalorder %s17, 1
      %p86 = por %p84, %p85
      %p87 = scmp.ne.s32.totalorder %s79, %s82
      %p88 = scmp.eq.s32.totalorder %s17, 0
      %p89 = por %p87, %p88
      %p90 = scmp.ne.s32.totalorder %s79, %s82
      %p91 = scmp.eq.s32.totalorder %s22, 1
      %p92 = por %p90, %p91
      %p93 = scmp.ne.s32.totalorder %s82, %s83
      %p94 = scmp.eq.s32.totalorder %s22, 0
      %p95 = por %p93, %p94
      %p96 = scmp.ne.s32.totalorder %s82, %s83
      %p97 = scmp.eq.s32.totalorder %s23, 1
      %p98 = por %p96, %p97
      %p100 = scmp.ne.s32.totalorder %s83, %s99
      %p101 = scmp.eq.s32.totalorder %s23, 0
      %p102 = por %p100, %p101
      %p103 = scmp.le.s32.totalorder 1, %s17
      %p104 = scmp.lt.s32.totalorder %s17, 3
      %p105 = pnand %p103, %p104
      %p106 = pneg %p105
      // Predicated region
      $region9: #{tpu_custom_call.1} parent=5 // pred_check
        _
      $region10: #{tpu_custom_call.1} parent=5 // pred_check_branch
        %108 = sbr.rel (%p105) target = $region12
      $region11: #{tpu_custom_call.1} parent=5 // pred_region
        %s109 = ssub.s32 %s17, 1
      $region12: #{tpu_custom_call.1} parent=5 // pred_fallthru
        _
      %p110 = scmp.lt.s32.totalorder %s17, 2
      // Predicated region
      $region13: #{tpu_custom_call.1} parent=5 // pred_check
        %p111 = pneg %p110
      $region14: #{tpu_custom_call.1} parent=5 // pred_check_branch
        %113 = sbr.rel (%p111) target = $region16
      $region15: #{tpu_custom_call.1} parent=5 // pred_region
        // Predicated region
        $region17: #{tpu_custom_call.1} parent=15 // pred_check
          %p114 = pneg %p37
        $region18: #{tpu_custom_call.1} parent=15 // pred_check_branch
          %116 = sbr.rel (%p114) target = $region20
        $region19: #{tpu_custom_call.1} parent=15 // pred_region
          %s117 = sand.u32 %s27, 1
          %s118 = scalar_lea.sflag [#allocation3], %s117
          %s119 = sand.u32 %s27, 1
          %s120 = smul.addr %s119, 16
          %s121 = scalar_lea.vmem [#allocation2], %s120
          %s123 = ssub.s32 256, 256
          %124 = vsyncadd %s118, %s123
          %s125 = smul.addr %s17, 2
          %s126 = smul.addr %s125, 128
          %s127 = scalar_lea.hbm %s0, %s126
          %s129 = sshll.u32 %s121, 4
          %s130 = int_to_ptr.vmem [resolvable:$true] %s129
          %132 = dma.hbm_to_vmem [thread:$0]  %s127, 256, %s130, %s118
        $region20: #{tpu_custom_call.1} parent=15 // pred_fallthru
          _
        // Predicated region
        $region21: #{tpu_custom_call.1} parent=15 // pred_check
          %p133 = pneg %p63
        $region22: #{tpu_custom_call.1} parent=15 // pred_check_branch
          %135 = sbr.rel (%p133) target = $region24
        $region23: #{tpu_custom_call.1} parent=15 // pred_region
          %s136 = sand.u32 %s53, 1
          %s137 = scalar_lea.sflag [#allocation6], %s136
          %s138 = sand.u32 %s53, 1
          %s139 = smul.addr %s138, 16
          %s140 = scalar_lea.vmem [#allocation5], %s139
          %s142 = ssub.s32 256, 256
          %143 = vsyncadd %s137, %s142
          %s144 = smul.addr %s17, 2
          %s145 = smul.addr %s144, 128
          %s146 = scalar_lea.hbm %s1, %s145
          %s148 = sshll.u32 %s140, 4
          %s149 = int_to_ptr.vmem [resolvable:$true] %s148
          %151 = dma.hbm_to_vmem [thread:$0]  %s146, 256, %s149, %s137
        $region24: #{tpu_custom_call.1} parent=15 // pred_fallthru
          _
      $region16: #{tpu_custom_call.1} parent=5 // pred_fallthru
        _
      %p152 = scmp.le.s32.totalorder 1, %s17
      %p153 = scmp.lt.s32.totalorder %s17, 3
      %p154 = pnand %p152, %p153
      %p155 = pneg %p154
      // Predicated region
      $region25: #{tpu_custom_call.1} parent=5 // pred_check
        _
      $region26: #{tpu_custom_call.1} parent=5 // pred_check_branch
        %157 = sbr.rel (%p154) target = $region28
      $region27: #{tpu_custom_call.1} parent=5 // pred_region
        %s158 = ssub.s32 %s17, 1
        %s159 = sand.u32 %s30, 1
        %s160 = scalar_lea.sflag [#allocation3], %s159
        %s161 = sand.u32 %s30, 1
        %s162 = smul.addr %s161, 16
        %s163 = scalar_lea.vmem [#allocation2], %s162
        // Predicated region
        $region29: #{tpu_custom_call.1} parent=27 // pred_check
          %p164 = pneg %p43
        $region30: #{tpu_custom_call.1} parent=27 // pred_check_branch
          %166 = sbr.rel (%p164) target = $region32
        $region31: #{tpu_custom_call.1} parent=27 // pred_region
          %167 = dma.done %s160, 256
        $region32: #{tpu_custom_call.1} parent=27 // pred_fallthru
          _
        %s168 = sand.u32 %s56, 1
        %s169 = scalar_lea.sflag [#allocation6], %s168
        %s170 = sand.u32 %s56, 1
        %s171 = smul.addr %s170, 16
        %s172 = scalar_lea.vmem [#allocation5], %s171
        // Predicated region
        $region33: #{tpu_custom_call.1} parent=27 // pred_check
          %p173 = pneg %p69
        $region34: #{tpu_custom_call.1} parent=27 // pred_check_branch
          %175 = sbr.rel (%p173) target = $region36
        $region35: #{tpu_custom_call.1} parent=27 // pred_region
          %176 = dma.done %s169, 256
        $region36: #{tpu_custom_call.1} parent=27 // pred_fallthru
          _
        %s177 = sand.u32 %s30, 1
        %s178 = scalar_lea.sflag [#allocation3], %s177
        %s179 = sand.u32 %s30, 1
        %s180 = smul.addr %s179, 16
        %s181 = scalar_lea.vmem [#allocation2], %s180
        %p182 = pneg %p43
        %p183 = pneg %p40
        %s184 = sand.u32 %s56, 1
        %s185 = scalar_lea.sflag [#allocation6], %s184
        %s186 = sand.u32 %s56, 1
        %s187 = smul.addr %s186, 16
        %s188 = scalar_lea.vmem [#allocation5], %s187
        %p189 = pneg %p69
        %p190 = pneg %p66
        %p191 = pneg %p95
        %p192 = pneg %p92
        %s193 = sand.u32 %s82, 1
        %s194 = scalar_lea.sflag [#allocation4], %s193
        %s195 = sand.u32 %s82, 1
        %s196 = smul.addr %s195, 8
        %s197 = scalar_lea.vmem [#allocation7], %s196
        %v198 = vld [vmem:[%s163] sm:$0xff]
        %v199 = vld [vmem:[%s163 + $0x8] sm:$0xff]
        %v200 = vld [vmem:[%s172] sm:$0xff]
        %v201 = vld [vmem:[%s172 + $0x8] sm:$0xff]
        %202 = vrot.lane.b32.xlu0 %v198, 1
        %v203 = vpop.permute.xlu0 %202
        %204 = vrot.lane.b32.xlu0 %v199, 1
        %v205 = vpop.permute.xlu0 %204
        %v206 = vlaneseq
        %v207 = vand.u32 %v206, 127
        %vm208 = vcmp.lt.s32.totalorder %v207, 1
        %v209 = vsel %vm208, %v203, %v205
        %v210 = vsel %vm208, %v205, %v203
        %v211 = vsub.f32 %v198, %v210
        %v212 = vsub.f32 %v199, %v209
        %v213 = vand.u32 2147483647, %v211
        %v214 = vand.u32 2147483647, %v212
        %215 = vrot.lane.b32.xlu0 %v200, 1
        %v216 = vpop.permute.xlu0 %215
        %217 = vrot.lane.b32.xlu0 %v201, 1
        %v218 = vpop.permute.xlu0 %217
        %v219 = vsel %vm208, %v216, %v218
        %v220 = vsel %vm208, %v218, %v216
        %v221 = vsub.f32 %v200, %v220
        %v222 = vsub.f32 %v201, %v219
        %v223 = vand.u32 2147483647, %v221
        %v224 = vand.u32 2147483647, %v222
        %v225 = vsub.f32 %v213, %v223
        %v226 = vsub.f32 %v214, %v224
        %v227 = vand.u32 2147483647, %v225
        %v228 = vand.u32 2147483647, %v226
        %229 = vrot.lane.b32.xlu0 %v198, 16
        %v230 = vpop.permute.xlu0 %229
        %231 = vrot.lane.b32.xlu0 %v199, 16
        %v232 = vpop.permute.xlu0 %231
        %vm233 = vcmp.lt.s32.totalorder %v207, 16
        %v234 = vsel %vm233, %v230, %v232
        %v235 = vsel %vm233, %v232, %v230
        %v236 = vsub.f32 %v198, %v235
        %v237 = vsub.f32 %v199, %v234
        %v238 = vand.u32 2147483647, %v236
        %v239 = vand.u32 2147483647, %v237
        %240 = vrot.lane.b32.xlu0 %v200, 16
        %v241 = vpop.permute.xlu0 %240
        %242 = vrot.lane.b32.xlu0 %v201, 16
        %v243 = vpop.permute.xlu0 %242
        %v244 = vsel %vm233, %v241, %v243
        %v245 = vsel %vm233, %v243, %v241
        %v246 = vsub.f32 %v200, %v245
        %v247 = vsub.f32 %v201, %v244
        %v248 = vand.u32 2147483647, %v246
        %v249 = vand.u32 2147483647, %v247
        %v250 = vsub.f32 %v238, %v248
        %v251 = vsub.f32 %v239, %v249
        %v252 = vand.u32 2147483647, %v250
        %v253 = vand.u32 2147483647, %v251
        %v254 = vadd.s32 %v207, 128
        %vm255 = vcmp.lt.s32.totalorder %v207, 0
        %v256 = vsub.s32 0, %v207
        %v257 = vsel %vm255, %v256, %v207
        %v258 = vshrl.u32 %v257, 4
        %v259 = vand.u32 %v257, 15
        %v260 = vsub.s32 0, %v259
        %v261 = vsel %vm255, %v260, %v259
        %vm262 = vcmp.lt.s32.totalorder %v254, 0
        %v263 = vsub.s32 0, %v254
        %v264 = vsel %vm262, %v263, %v254
        %v265 = vshrl.u32 %v264, 4
        %v266 = vand.u32 %v264, 15
        %v267 = vsub.s32 0, %v266
        %v268 = vsel %vm262, %v267, %v266
        %vm269 = vcmp.ne.s32.totalorder %v261, 0
        %vm270 = vcmp.ne.s32.totalorder %v268, 0
        %vm271 = vcmp.lt.s32.totalorder %v261, 0
        %vm272 = vcmp.lt.s32.totalorder %v268, 0
        %vm273 = vmand %vm271, %vm269
        %vm274 = vmand %vm272, %vm270
        %v275 = vadd.s32 %v261, 16
        %v276 = vadd.s32 %v268, 16
        %v277 = vsel %vm273, %v275, %v261
        %v278 = vsel %vm274, %v276, %v268
        %vm279 = vcmp.ne.s32.totalorder %v277, 0
        %vm280 = vcmp.ne.s32.totalorder %v278, 0
        %vm281 = vcmp.ge.s32.totalorder %v207, 16
        %vm282 = vcmp.ge.s32.totalorder %v254, 16
        %v283 = vsel %vm279, 1, 0
        %v284 = vsel %vm280, 1, 0
        %vm285 = vcmp.eq.s32.totalorder %v283, 1
        %vm286 = vcmp.eq.s32.totalorder %v284, 1
        %v287 = vsel %vm285, %v227, 0.0
        %v288 = vsel %vm286, %v228, 0.0
        %v289 = vsel %vm281, 1, 0
        %v290 = vsel %vm282, 1, 0
        %vm291 = vcmp.eq.s32.totalorder %v289, 1
        %vm292 = vcmp.eq.s32.totalorder %v290, 1
        %v293 = vsel %vm291, %v252, 0.0
        %v294 = vsel %vm292, %v253, 0.0
        %v295 = vadd.f32 %v287, %v293
        %v296 = vadd.f32 %v288, %v294
        %v297 = vlaneseq
        %v298 = vshrl.u32 %v297, 7
        %s299 = smul.u32 %s22, 8
        %v300 = vstv %s299
        %v301 = vadd.s32 %v298, %v300
        %vm302 = vcmp.lt.s32.totalorder %v301, 16
        %v303 = vsel %vm302, 1, 0
        %vm304 = vcmp.eq.s32.totalorder %v303, 1
        %v305 = vsel %vm304, %v295, 0.0
        %v306 = vsel %vm304, %v296, 0.0
        %v307 = vadd.f32 %v305, %v306
        %308 = vadd.xlane.f32.xlu0 %v307
        %v309 = vpop.xlane.xlu0 %308
        %v310 = vrot.slane %v309, 4
        %v311 = vadd.f32 %v309, %v310
        %v312 = vrot.slane %v311, 2
        %v313 = vadd.f32 %v311, %v312
        %v314 = vrot.slane %v313, 1
        %v315 = vadd.f32 %v313, %v314
        %s316 = vtos %v315
        %v317 = vstv %s316
        %318 = vst [vmem:[%s197] sm:$0xff] %v317
        %s319 = sand.u32 %s82, 1
        %s320 = scalar_lea.sflag [#allocation4], %s319
        %s321 = sand.u32 %s82, 1
        %s322 = smul.addr %s321, 8
        %s323 = scalar_lea.vmem [#allocation7], %s322
        // Predicated region
        $region37: #{tpu_custom_call.1} parent=27 // pred_check
          %p324 = pneg %p92
        $region38: #{tpu_custom_call.1} parent=27 // pred_check_branch
          %326 = sbr.rel (%p324) target = $region40
        $region39: #{tpu_custom_call.1} parent=27 // pred_region
          %s328 = ssub.s32 128, 128
          %329 = vsyncadd %s320, %s328
          %s330 = smul.addr %s22, 128
          %s331 = scalar_lea.hbm %s2, %s330
          %s333 = sshll.u32 %s323, 4
          %s334 = int_to_ptr.vmem [resolvable:$true] %s333
          %336 = dma.vmem_to_hbm [thread:$0]  %s334, 128, %s331, %s320
        $region40: #{tpu_custom_call.1} parent=27 // pred_fallthru
          _
      $region28: #{tpu_custom_call.1} parent=5 // pred_fallthru
        _
      %p337 = scmp.le.s32.totalorder 2, %s17
      // Predicated region
      $region41: #{tpu_custom_call.1} parent=5 // pred_check
        %p338 = pneg %p337
      $region42: #{tpu_custom_call.1} parent=5 // pred_check_branch
        %340 = sbr.rel (%p338) target = $region44
      $region43: #{tpu_custom_call.1} parent=5 // pred_region
        %s341 = ssub.s32 %s17, 2
        // Predicated region
        $region45: #{tpu_custom_call.1} parent=43 // pred_check
          %p342 = pneg %p98
        $region46: #{tpu_custom_call.1} parent=43 // pred_check_branch
          %344 = sbr.rel (%p342) target = $region48
        $region47: #{tpu_custom_call.1} parent=43 // pred_region
          %s345 = sand.u32 %s83, 1
          %s346 = scalar_lea.sflag [#allocation4], %s345
          %s347 = sand.u32 %s83, 1
          %s348 = smul.addr %s347, 8
          %s349 = scalar_lea.vmem [#allocation7], %s348
          %350 = dma.done %s346, 128
        $region48: #{tpu_custom_call.1} parent=43 // pred_fallthru
          _
      $region44: #{tpu_custom_call.1} parent=5 // pred_fallthru
        _
    $region6: #{tpu_custom_call.1} parent=1 // loop_footer
      %s21 = sadd.s32 1, %s17
    $region7: #{tpu_custom_call.1} parent=1 // loop_footer_branch
      %16 = sbr.rel target = $region3
    $region8: #{tpu_custom_call.1} parent=1 // loop_exit
      _
    %351 = vsyncpa [#allocation3], 1
    %s352 = scalar_lea.sflag [#allocation3], 1
    %353 = vsyncpa %s352, 1
    %354 = vsyncpa [#allocation6], 1
    %s355 = scalar_lea.sflag [#allocation6], 1
    %356 = vsyncpa %s355, 1
    %357 = vsyncpa [#allocation4], 1
    %s358 = scalar_lea.sflag [#allocation4], 1
    %359 = vsyncpa %s358, 1

</llo_original>
